<compile_context>
chip_gen: v6e
topology: v6e:2x2x1
jax: 0.10.0
libtpu: 0.0.40
codegen_flags: <defaults>
</compile_context>

<pallas_src>
import jax
import jax.numpy as jnp
import numpy as np
from jax.experimental import pallas as pl
from jax.experimental.pallas import tpu as pltpu


def engine_kernel(attn_ref, h_ref, adj_ref, ebias_ref,
                  node_p_ref, w_cat_ref, g_p_ref,
                  attn_out_ref, h_out_ref, trans_out_ref):
    # One batch chunk of Bt graphs, rows flattened to M = Bt*V:
    #   attn_ref  : (M, 1)    attention over from-nodes v1
    #   h_ref     : (M, D)    short_memory.node_states
    #   adj_ref   : (M, M)    block-diagonal attd_over_edges mask
    #   ebias_ref : (M, M)    block-diagonal etype_params bias
    #   node_p_ref: (M, D)    long_memory.node_params tiled over the Bt graphs
    #   w_cat_ref : (D, 2D)   bf16 fused [W_trans | W_msg]
    #   g_p_ref   : (1, D)    long_memory.global_params
    M, D = h_ref.shape

    attn = attn_ref[...]                                  # (M, 1) f32
    h = h_ref[...]                                        # (M, D) f32
    adj = adj_ref[...]                                    # (M, M) f32

    # fuse node states + per-node params
    hf = h + node_p_ref[...]                              # (M, D) f32
    hf_bf = hf.astype(jnp.bfloat16)

    # --- single fused weight matmul: (M, D) @ (D, 2D), bf16 in / f32 acc.
    qm = jnp.dot(hf_bf, w_cat_ref[...],
                 preferred_element_type=jnp.float32)      # (M, 2D)
    q_bf = qm[:, :D].astype(jnp.bfloat16)                 # transition query
    msg = jnp.tanh(qm[:, D:])                             # (M, D) f32 message

    # --- compute_transition: bilinear logits over the merged (block-diagonal)
    # edge set, one (M, D) x (D, M) MXU matmul (rhs consumed transposed).
    logits = jnp.einsum('vd,wd->vw', q_bf, hf_bf,
                        preferred_element_type=jnp.float32) + ebias_ref[...]

    # masked softmax over to-nodes v2; block-diag adj also masks cross-graph
    # entries, so each graph's softmax is restricted to its own neighbours.
    neg = jnp.full_like(logits, -1e30)
    masked = jnp.where(adj > 0, logits, neg)
    mx = jnp.max(masked, axis=-1, keepdims=True)
    p = jnp.where(adj > 0, jnp.exp(masked - mx), jnp.zeros_like(masked))
    denom = jnp.sum(p, axis=-1, keepdims=True) + 1e-9
    transition = p / denom                                # exact divide

    # --- edge weights: attn(v1) * transition(v1, v2)
    edge_w = transition * attn                            # (M, M)

    # --- _update_attn: attn'[v2] = sum_v1 attn[v1] * T[v1, v2]  (sublane reduce)
    attn_new = jnp.sum(edge_w, axis=0, keepdims=True)     # (1, M) f32

    # --- _aggregate: attention-weighted sum of incoming messages per v2,
    # one (M, M) x (M, D) matmul contracting v1 (LHS consumed transposed).
    aggr = jnp.einsum('vw,vd->wd',
                      edge_w.astype(jnp.bfloat16),
                      msg.astype(jnp.bfloat16),
                      preferred_element_type=jnp.float32)  # (M, D)

    # --- _update_nodes: residual tanh update with global params
    h_new = jnp.tanh(h + aggr + g_p_ref[...])              # (M, D)

    attn_out_ref[...] = attn_new.reshape(1, 1, M)
    h_out_ref[...] = h_new
    trans_out_ref[...] = transition


def engine_step(attn, h, adj, edge_bias, node_params, w_trans, w_msg, g_params,
                batch_tile=None):
    """One reasoning step. attn: (B,1,V), h: (B,V,D), adj/edge_bias: (B,V,V)."""
    B, V, D = h.shape
    if batch_tile is None:
        # Single grid step by default: working set is tiny, and a multi-step
        # grid is just a serial loop on single-TC chips (v5e/v6e).
        # On v7x pass batch_tile = B // 2 only if (B // 2) * V >= 128.
        batch_tile = B
    assert B % batch_tile == 0, "batch must be divisible by batch_tile"
    Bt = batch_tile
    C = B // Bt
    M = Bt * V            # rows per chunk (128 for B=8, V=16)

    # --- Wrapper-side layout plumbing (tiny arrays, free relative to kernel).
    attn_col = attn.reshape(B * V, 1)                    # attention as a column
    h_flat = h.reshape(B * V, D)
    node_p_tiled = jnp.tile(node_params.reshape(V, D), (Bt, 1))      # (M, D)
    g_p2 = g_params.reshape(1, D)
    # fused bf16 weights [W_trans | W_msg]
    w_cat = jnp.concatenate([w_trans, w_msg], axis=1).astype(jnp.bfloat16)

    def to_block_diag(x):                                 # (B,V,V) -> (C*M, M)
        xc = x.reshape(C, Bt, V, V)
        eye = jnp.eye(Bt, dtype=x.dtype)
        bd = xc[:, :, :, None, :] * eye[None, :, None, :, None]
        return bd.reshape(C * M, M)

    adj_bd = to_block_diag(adj)
    ebias_bd = to_block_diag(edge_bias)

    chunk2 = lambda shape: pl.BlockSpec(shape, lambda c: (c, 0))
    shared2 = lambda shape: pl.BlockSpec(shape, lambda c: (0, 0))

    out_shapes = (
        jax.ShapeDtypeStruct((C, 1, M), jnp.float32),     # updated attention (lane-dense)
        jax.ShapeDtypeStruct((C * M, D), jnp.float32),    # updated node states
        jax.ShapeDtypeStruct((C * M, M), jnp.float32),    # block-diag transition (lane-dense)
    )
    attn_bd, h_new_flat, trans_bd = pl.pallas_call(
        engine_kernel,
        out_shape=out_shapes,
        grid_spec=pltpu.PrefetchScalarGridSpec(
            num_scalar_prefetch=0,
            grid=(C,),
            in_specs=[
                chunk2((M, 1)),        # attn
                chunk2((M, D)),        # node states
                chunk2((M, M)),        # block-diag adjacency
                chunk2((M, M)),        # block-diag edge-type bias
                shared2((M, D)),       # node params (tiled)
                shared2((D, 2 * D)),   # fused [W_trans | W_msg] (bf16)
                shared2((1, D)),       # global params
            ],
            out_specs=[
                pl.BlockSpec((1, 1, M), lambda c: (c, 0, 0)),
                chunk2((M, D)),
                chunk2((M, M)),
            ],
        ),
        compiler_params=pltpu.CompilerParams(dimension_semantics=("parallel",)),
    )(attn_col, h_flat, adj_bd, ebias_bd, node_p_tiled, w_cat, g_p2)

    # --- Wrapper-side unpacking (layout plumbing).
    attn_new = attn_bd.reshape(B, 1, V)
    h_new = h_new_flat.reshape(B, V, D)
    t5 = trans_bd.reshape(C, Bt, V, Bt, V)
    idx = jnp.arange(Bt)
    transition = jnp.transpose(t5[:, idx, :, idx, :], (1, 0, 2, 3)).reshape(B, V, V)
    return attn_new, h_new, transition


def engine_step_ref(attn, h, adj, edge_bias, node_params, w_trans, w_msg, g_params):
    """Pure-JAX reference with the same matmul-operand precision policy."""
    bf16, f32 = jnp.bfloat16, jnp.float32
    hf = h + node_params[None]
    hf_bf = hf.astype(bf16)
    q = jnp.einsum('bvd,de->bve', hf_bf, w_trans.astype(bf16),
                   preferred_element_type=f32)
    msg = jnp.tanh(jnp.einsum('bvd,de->bve', hf_bf, w_msg.astype(bf16),
                              preferred_element_type=f32))
    logits = jnp.einsum('bvd,bwd->bvw', q.astype(bf16), hf_bf,
                        preferred_element_type=f32) + edge_bias
    masked = jnp.where(adj > 0, logits, -1e30)
    m = jnp.max(masked, axis=-1, keepdims=True)
    p = jnp.where(adj > 0, jnp.exp(masked - m), 0.0)
    transition = p / (jnp.sum(p, axis=-1, keepdims=True) + 1e-9)
    attn_new = jnp.einsum('bov,bvw->bow', attn, transition)
    edge_w = transition * jnp.swapaxes(attn, 1, 2)
    message_aggr = jnp.einsum('bvw,bvd->bwd', edge_w.astype(bf16), msg.astype(bf16),
                              preferred_element_type=f32)
    h_new = jnp.tanh(h + message_aggr + g_params[None])
    return attn_new, h_new, transition


if __name__ == "__main__":
    B, V, D, E = 8, 16, 32, 4   # batch, n_nodes, hidden, n_etypes  (Bt*V = 128)

    key = jax.random.PRNGKey(0)
    k1, k2, k3, k4, k5, k6, k7 = jax.random.split(key, 7)

    # short_memory.node_states and attention tracker state
    h = jax.random.normal(k1, (B, V, D), dtype=jnp.float32)
    attn = jax.nn.softmax(jax.random.normal(k2, (B, 1, V), dtype=jnp.float32), axis=-1)

    # long_memory parameters (deterministic synthetic init)
    node_params = 0.1 * jax.random.normal(k3, (V, D), dtype=jnp.float32)
    w_trans = jax.random.normal(k4, (D, D), dtype=jnp.float32) / np.sqrt(D)
    w_msg = jax.random.normal(k5, (D, D), dtype=jnp.float32) / np.sqrt(D)
    etype_bias = 0.1 * jax.random.normal(k6, (E,), dtype=jnp.float32)
    g_params = 0.1 * jax.random.normal(k7, (1, D), dtype=jnp.float32)

    # graph_accessor: deterministic ring graph with self loops, edge types (v1+v2) % E
    v_idx = np.arange(V)
    adj_np = np.zeros((V, V), dtype=np.float32)
    adj_np[v_idx, v_idx] = 1.0
    adj_np[v_idx, (v_idx + 1) % V] = 1.0
    adj_np[v_idx, (v_idx + 3) % V] = 1.0
    adj = jnp.broadcast_to(jnp.asarray(adj_np), (B, V, V))

    et_idx = (v_idx[:, None] + v_idx[None, :]) % E                     # (V, V) edge types
    # Glue: gather etype_params per edge in plain JAX (data-dependent indexing).
    edge_bias = adj * jnp.take(etype_bias, jnp.asarray(et_idx))[None]  # (B, V, V)

    attn_new, h_new, transition = jax.block_until_ready(
        engine_step(attn, h, adj, edge_bias, node_params, w_trans, w_msg, g_params))

    attn_ref_o, h_ref_o, trans_ref_o = engine_step_ref(
        attn, h, adj, edge_bias, node_params, w_trans, w_msg, g_params)

    # Tolerance covers bf16 MXU operand rounding; softmax division is exact.
    tol = dict(rtol=3e-3, atol=3e-3)
    np.testing.assert_allclose(np.asarray(attn_new), np.asarray(attn_ref_o), **tol)
    np.testing.assert_allclose(np.asarray(h_new), np.asarray(h_ref_o), **tol)
    np.testing.assert_allclose(np.asarray(transition), np.asarray(trans_ref_o), **tol)

    # TODO(synk): compute_transition_logits / compute_message are abstract
    # (NotImplementedError) in the reference; a standard bilinear-attention +
    # tanh-message instantiation is used here.
    print("KERNEL_OK")
</pallas_src>

<mosaic_0001>
module attributes {stable_mosaic.version = 11 : i64} {
  func.func @engine_kernel(%arg0: i32, %arg1: memref<128x1xf32, #tpu.memory_space<vmem>>, %arg2: memref<128x32xf32, #tpu.memory_space<vmem>>, %arg3: memref<128x128xf32, #tpu.memory_space<vmem>>, %arg4: memref<128x128xf32, #tpu.memory_space<vmem>>, %arg5: memref<128x32xf32, #tpu.memory_space<vmem>>, %arg6: memref<32x64xbf16, #tpu.memory_space<vmem>>, %arg7: memref<1x32xf32, #tpu.memory_space<vmem>>, %arg8: memref<1x1x128xf32, #tpu.memory_space<vmem>>, %arg9: memref<128x32xf32, #tpu.memory_space<vmem>>, %arg10: memref<128x128xf32, #tpu.memory_space<vmem>>) attributes {dimension_semantics = [#tpu.dimension_semantics<parallel>], iteration_bounds = array<i64: 1>, scalar_prefetch = 0 : i64, scratch_operands = 0 : i64, tpu.core_type = #tpu.core_type<tc>, window_params = [{transform_indices = @transform_0, window_bounds = array<i64: 128, 1>}, {transform_indices = @transform_1, window_bounds = array<i64: 128, 32>}, {transform_indices = @transform_2, window_bounds = array<i64: 128, 128>}, {transform_indices = @transform_3, window_bounds = array<i64: 128, 128>}, {pipeline_mode = #tpu.pipeline_mode<synchronous>, transform_indices = @transform_4, window_bounds = array<i64: 128, 32>}, {pipeline_mode = #tpu.pipeline_mode<synchronous>, transform_indices = @transform_5, window_bounds = array<i64: 32, 64>}, {pipeline_mode = #tpu.pipeline_mode<synchronous>, transform_indices = @transform_6, window_bounds = array<i64: 1, 32>}, {transform_indices = @transform_7, window_bounds = array<i64: 1, 1, 128>}, {transform_indices = @transform_8, window_bounds = array<i64: 128, 32>}, {transform_indices = @transform_9, window_bounds = array<i64: 128, 128>}]} {
    %c0 = arith.constant 0 : index
    %c0_0 = arith.constant 0 : index
    %0 = vector.load %arg1[%c0, %c0_0] : memref<128x1xf32, #tpu.memory_space<vmem>>, vector<128x1xf32>
    %c0_1 = arith.constant 0 : index
    %c0_2 = arith.constant 0 : index
    %1 = vector.load %arg2[%c0_1, %c0_2] : memref<128x32xf32, #tpu.memory_space<vmem>>, vector<128x32xf32>
    %c0_3 = arith.constant 0 : index
    %c0_4 = arith.constant 0 : index
    %2 = vector.load %arg3[%c0_3, %c0_4] : memref<128x128xf32, #tpu.memory_space<vmem>>, vector<128x128xf32>
    %c0_5 = arith.constant 0 : index
    %c0_6 = arith.constant 0 : index
    %3 = vector.load %arg5[%c0_5, %c0_6] : memref<128x32xf32, #tpu.memory_space<vmem>>, vector<128x32xf32>
    %4 = arith.addf %1, %3 : vector<128x32xf32>
    %5 = arith.truncf %4 : vector<128x32xf32> to vector<128x32xbf16>
    %c0_7 = arith.constant 0 : index
    %c0_8 = arith.constant 0 : index
    %6 = vector.load %arg6[%c0_7, %c0_8] : memref<32x64xbf16, #tpu.memory_space<vmem>>, vector<32x64xbf16>
    %cst = arith.constant dense<0.000000e+00> : vector<128x64xf32>
    %7 = tpu.matmul %5, %6, %cst {dimension_numbers = #tpu.dot_dimension_numbers<[1], [0], [0], [1], [0, 0, 1, 1], [], []>} : vector<128x32xbf16>, vector<32x64xbf16>, vector<128x64xf32> -> vector<128x64xf32>
    %8 = vector.extract_strided_slice %7 {offsets = [0, 0], sizes = [128, 32], strides = [1, 1]} : vector<128x64xf32> to vector<128x32xf32>
    %9 = arith.truncf %8 : vector<128x32xf32> to vector<128x32xbf16>
    %10 = vector.extract_strided_slice %7 {offsets = [0, 32], sizes = [128, 32], strides = [1, 1]} : vector<128x64xf32> to vector<128x32xf32>
    %11 = math.tanh %10 : vector<128x32xf32>
    "tpu.trace_start"() <{level = 10 : i32, message = "vd,wd->vw"}> : () -> ()
    %cst_9 = arith.constant dense<0.000000e+00> : vector<128x128xf32>
    %12 = tpu.matmul %9, %5, %cst_9 {dimension_numbers = #tpu.dot_dimension_numbers<[1], [1], [0], [0], [0, 0, 1, 0], [], []>} : vector<128x32xbf16>, vector<128x32xbf16>, vector<128x128xf32> -> vector<128x128xf32>
    "tpu.trace_stop"() : () -> ()
    %c0_10 = arith.constant 0 : index
    %c0_11 = arith.constant 0 : index
    %13 = vector.load %arg4[%c0_10, %c0_11] : memref<128x128xf32, #tpu.memory_space<vmem>>, vector<128x128xf32>
    %14 = arith.addf %12, %13 : vector<128x128xf32>
    %cst_12 = arith.constant -1.000000e+30 : f32
    %15 = vector.broadcast %cst_12 : f32 to vector<128x128xf32>
    %cst_13 = arith.constant 0.000000e+00 : f32
    %16 = vector.broadcast %cst_13 : f32 to vector<128x128xf32>
    %17 = arith.cmpf ogt, %2, %16 : vector<128x128xf32>
    %18 = arith.select %17, %14, %15 : vector<128x128xi1>, vector<128x128xf32>
    %cst_14 = arith.constant dense<0xFF800000> : vector<128xf32>
    %19 = vector.multi_reduction <maximumf>, %18, %cst_14 [1] : vector<128x128xf32> to vector<128xf32>
    %20 = vector.shape_cast %19 : vector<128xf32> to vector<128x1xf32>
    %cst_15 = arith.constant 0.000000e+00 : f32
    %21 = vector.broadcast %cst_15 : f32 to vector<128x128xf32>
    %22 = arith.cmpf ogt, %2, %21 : vector<128x128xf32>
    %23 = vector.broadcast %20 : vector<128x1xf32> to vector<128x128xf32>
    %24 = arith.subf %18, %23 : vector<128x128xf32>
    %25 = math.exp %24 : vector<128x128xf32>
    %cst_16 = arith.constant 0.000000e+00 : f32
    %26 = vector.broadcast %cst_16 : f32 to vector<128x128xf32>
    %27 = arith.select %22, %25, %26 : vector<128x128xi1>, vector<128x128xf32>
    %cst_17 = arith.constant dense<0.000000e+00> : vector<128xf32>
    %28 = vector.multi_reduction <add>, %27, %cst_17 [1] : vector<128x128xf32> to vector<128xf32>
    %29 = vector.shape_cast %28 : vector<128xf32> to vector<128x1xf32>
    %cst_18 = arith.constant 9.99999971E-10 : f32
    %30 = vector.broadcast %cst_18 : f32 to vector<128x1xf32>
    %31 = arith.addf %29, %30 : vector<128x1xf32>
    %32 = vector.broadcast %31 : vector<128x1xf32> to vector<128x128xf32>
    %33 = arith.divf %27, %32 : vector<128x128xf32>
    %34 = vector.broadcast %0 : vector<128x1xf32> to vector<128x128xf32>
    %35 = arith.mulf %33, %34 : vector<128x128xf32>
    %cst_19 = arith.constant dense<0.000000e+00> : vector<128xf32>
    %36 = vector.multi_reduction <add>, %35, %cst_19 [0] : vector<128x128xf32> to vector<128xf32>
    %37 = vector.shape_cast %36 : vector<128xf32> to vector<1x128xf32>
    %38 = arith.truncf %35 : vector<128x128xf32> to vector<128x128xbf16>
    %39 = arith.truncf %11 : vector<128x32xf32> to vector<128x32xbf16>
    "tpu.trace_start"() <{level = 10 : i32, message = "vw,vd->wd"}> : () -> ()
    %cst_20 = arith.constant dense<0.000000e+00> : vector<128x32xf32>
    %40 = tpu.matmul %38, %39, %cst_20 {dimension_numbers = #tpu.dot_dimension_numbers<[0], [0], [1], [1], [0, 1, 1, 1], [], []>} : vector<128x128xbf16>, vector<128x32xbf16>, vector<128x32xf32> -> vector<128x32xf32>
    "tpu.trace_stop"() : () -> ()
    %41 = arith.addf %1, %40 : vector<128x32xf32>
    %c0_21 = arith.constant 0 : index
    %c0_22 = arith.constant 0 : index
    %42 = vector.load %arg7[%c0_21, %c0_22] : memref<1x32xf32, #tpu.memory_space<vmem>>, vector<1x32xf32>
    %43 = vector.broadcast %42 : vector<1x32xf32> to vector<128x32xf32>
    %44 = arith.addf %41, %43 : vector<128x32xf32>
    %45 = math.tanh %44 : vector<128x32xf32>
    %46 = vector.shape_cast %37 : vector<1x128xf32> to vector<1x1x128xf32>
    %c0_23 = arith.constant 0 : index
    %c0_24 = arith.constant 0 : index
    %c0_25 = arith.constant 0 : index
    %47 = vector.load %arg8[%c0_23, %c0_24, %c0_25] : memref<1x1x128xf32, #tpu.memory_space<vmem>>, vector<1x1x128xf32>
    tpu.vector_store %arg8[%c0_23, %c0_24, %c0_25], %46 {strides = array<i32>} : memref<1x1x128xf32, #tpu.memory_space<vmem>>, vector<1x1x128xf32>,
    %c0_26 = arith.constant 0 : index
    %c0_27 = arith.constant 0 : index
    %48 = vector.load %arg9[%c0_26, %c0_27] : memref<128x32xf32, #tpu.memory_space<vmem>>, vector<128x32xf32>
    tpu.vector_store %arg9[%c0_26, %c0_27], %45 {strides = array<i32>} : memref<128x32xf32, #tpu.memory_space<vmem>>, vector<128x32xf32>,
    %c0_28 = arith.constant 0 : index
    %c0_29 = arith.constant 0 : index
    %49 = vector.load %arg10[%c0_28, %c0_29] : memref<128x128xf32, #tpu.memory_space<vmem>>, vector<128x128xf32>
    tpu.vector_store %arg10[%c0_28, %c0_29], %33 {strides = array<i32>} : memref<128x128xf32, #tpu.memory_space<vmem>>, vector<128x128xf32>,
    return
  }
  func.func @transform_0(%arg0: i32) -> (i32, i32) {
    %c0_i32 = arith.constant 0 : i32
    %c0_i32_0 = arith.constant 0 : i32
    return %arg0, %c0_i32 : i32, i32
  }
  func.func @transform_1(%arg0: i32) -> (i32, i32) {
    %c0_i32 = arith.constant 0 : i32
    %c0_i32_0 = arith.constant 0 : i32
    return %arg0, %c0_i32 : i32, i32
  }
  func.func @transform_2(%arg0: i32) -> (i32, i32) {
    %c0_i32 = arith.constant 0 : i32
    %c0_i32_0 = arith.constant 0 : i32
    return %arg0, %c0_i32 : i32, i32
  }
  func.func @transform_3(%arg0: i32) -> (i32, i32) {
    %c0_i32 = arith.constant 0 : i32
    %c0_i32_0 = arith.constant 0 : i32
    return %arg0, %c0_i32 : i32, i32
  }
  func.func @transform_4(%arg0: i32) -> (i32, i32) {
    %c0_i32 = arith.constant 0 : i32
    %c0_i32_0 = arith.constant 0 : i32
    %c0_i32_1 = arith.constant 0 : i32
    return %c0_i32, %c0_i32_0 : i32, i32
  }
  func.func @transform_5(%arg0: i32) -> (i32, i32) {
    %c0_i32 = arith.constant 0 : i32
    %c0_i32_0 = arith.constant 0 : i32
    %c0_i32_1 = arith.constant 0 : i32
    return %c0_i32, %c0_i32_0 : i32, i32
  }
  func.func @transform_6(%arg0: i32) -> (i32, i32) {
    %c0_i32 = arith.constant 0 : i32
    %c0_i32_0 = arith.constant 0 : i32
    %c0_i32_1 = arith.constant 0 : i32
    return %c0_i32, %c0_i32_0 : i32, i32
  }
  func.func @transform_7(%arg0: i32) -> (i32, i32, i32) {
    %c0_i32 = arith.constant 0 : i32
    %c0_i32_0 = arith.constant 0 : i32
    %c0_i32_1 = arith.constant 0 : i32
    return %arg0, %c0_i32, %c0_i32_0 : i32, i32, i32
  }
  func.func @transform_8(%arg0: i32) -> (i32, i32) {
    %c0_i32 = arith.constant 0 : i32
    %c0_i32_0 = arith.constant 0 : i32
    return %arg0, %c0_i32 : i32, i32
  }
  func.func @transform_9(%arg0: i32) -> (i32, i32) {
    %c0_i32 = arith.constant 0 : i32
    %c0_i32_0 = arith.constant 0 : i32
    return %arg0, %c0_i32 : i32, i32
  }
}

</mosaic_0001>

<llo_original>
// kernel: tpu_custom_call.1
$region0: #{tpu_custom_call.1}
  #allocation0 [shape = 'u32[]', space=smem, size = 0x4, offset = 0x4, fixed_abs, tag = 'smem constant byte address 0x4 - core index']
  #allocation1 [shape = 'u32[144,128]{1,0:T(1,128)}', space=vmem, size = 0x12000, scoped, tag = 'internal scratch']
  %s0 = inlined_call_operand.vmem [shape: f32[128,1], index: 0, kind: input, shape index: {}]
  %s1 = inlined_call_operand.vmem [shape: f32[128,32], index: 1, kind: input, shape index: {}]
  %s2 = inlined_call_operand.vmem [shape: f32[128,128], index: 2, kind: input, shape index: {}]
  %s3 = inlined_call_operand.vmem [shape: f32[128,128], index: 3, kind: input, shape index: {}]
  %s4 = inlined_call_operand.vmem [shape: f32[128,32], index: 4, kind: input, shape index: {}]
  %s5 = inlined_call_operand.vmem [shape: bf16[32,64], index: 5, kind: input, shape index: {}]
  %s6 = inlined_call_operand.vmem [shape: f32[1,32], index: 6, kind: input, shape index: {}]
  %s7 = inlined_call_operand.hbm [shape: f32[1,1,128], index: 7, kind: output, shape index: {0}]
  %s8 = inlined_call_operand.vmem [shape: f32[128,32], index: 8, kind: output, shape index: {1}]
  %s9 = inlined_call_operand.hbm [shape: f32[128,128], index: 9, kind: output, shape index: {2}]
  %10 = xla_tuple %s7, %s8, %s9
  %s11 = sld [smem:[#allocation0]]
  $region54: #{tpu_custom_call.1} parent=0
    _
  %s13 = ssub.s32 1, %s11
  %s14 = scalar_select 0, %s13, %s11
  $region1: #{tpu_custom_call.1} parent=0
    #allocation2 [shape = 'u8[512]{0}', space=vmem, size = 0x400, scoped, tag = 'output window, operand 0, single buffered']
    #allocation3 [shape = 's32[1]{0}', space=sflag, size = 0x4, scoped, tag = 'scoped memory for tpu_custom_call.1']
    #allocation4 [shape = 'u8[65536]{0}', space=vmem, size = 0x10000, scoped, tag = 'output window, operand 2, single buffered']
    #allocation5 [shape = 's32[1]{0}', space=sflag, size = 0x4, scoped, tag = 'scoped memory for tpu_custom_call.1']
    %15 = vsyncpa [#allocation3], 0
    %16 = vsyncpa [#allocation5], 0
    // Predicated region
    $region2: #{tpu_custom_call.1} parent=1 // pred_check
      _
    $region3: #{tpu_custom_call.1} parent=1 // pred_check_branch
      %18 = sbr.rel (0) target = $region5
    $region4: #{tpu_custom_call.1} parent=1 // pred_region
      _
    $region5: #{tpu_custom_call.1} parent=1 // pred_fallthru
      _
    // Predicated region
    $region6: #{tpu_custom_call.1} parent=1 // pred_check
      _
    $region7: #{tpu_custom_call.1} parent=1 // pred_check_branch
      %20 = sbr.rel (0) target = $region9
    $region8: #{tpu_custom_call.1} parent=1 // pred_region
      _
    $region9: #{tpu_custom_call.1} parent=1 // pred_fallthru
      _
    // Predicated region
    $region10: #{tpu_custom_call.1} parent=1 // pred_check
      _
    $region11: #{tpu_custom_call.1} parent=1 // pred_check_branch
      %22 = sbr.rel (0) target = $region13
    $region12: #{tpu_custom_call.1} parent=1 // pred_region
      _
    $region13: #{tpu_custom_call.1} parent=1 // pred_fallthru
      _
    // Predicated region
    $region14: #{tpu_custom_call.1} parent=1 // pred_check
      _
    $region15: #{tpu_custom_call.1} parent=1 // pred_check_branch
      %24 = sbr.rel (0) target = $region17
    $region16: #{tpu_custom_call.1} parent=1 // pred_region
      _
    $region17: #{tpu_custom_call.1} parent=1 // pred_fallthru
      _
    // Predicated region
    $region18: #{tpu_custom_call.1} parent=1 // pred_check
      _
    $region19: #{tpu_custom_call.1} parent=1 // pred_check_branch
      %26 = sbr.rel (0) target = $region21
    $region20: #{tpu_custom_call.1} parent=1 // pred_region
      _
    $region21: #{tpu_custom_call.1} parent=1 // pred_fallthru
      _
    // Predicated region
    $region22: #{tpu_custom_call.1} parent=1 // pred_check
      _
    $region23: #{tpu_custom_call.1} parent=1 // pred_check_branch
      %28 = sbr.rel (0) target = $region25
    $region24: #{tpu_custom_call.1} parent=1 // pred_region
      _
    $region25: #{tpu_custom_call.1} parent=1 // pred_fallthru
      _
    // Predicated region
    $region26: #{tpu_custom_call.1} parent=1 // pred_check
      _
    $region27: #{tpu_custom_call.1} parent=1 // pred_check_branch
      %30 = sbr.rel (0) target = $region29
    $region28: #{tpu_custom_call.1} parent=1 // pred_region
      _
    $region29: #{tpu_custom_call.1} parent=1 // pred_fallthru
      _
    %v32 = vld [vmem:[%s0] sm:$0xff]
    %v33 = vld [vmem:[%s0 + $0x8] sm:$0xff]
    %v34 = vld [vmem:[%s0 + $0x10] sm:$0xff]
    %v35 = vld [vmem:[%s0 + $0x18] sm:$0xff]
    %v36 = vld [vmem:[%s0 + $0x20] sm:$0xff]
    %v37 = vld [vmem:[%s0 + $0x28] sm:$0xff]
    %v38 = vld [vmem:[%s0 + $0x30] sm:$0xff]
    %v39 = vld [vmem:[%s0 + $0x38] sm:$0xff]
    %v40 = vld [vmem:[%s0 + $0x40] sm:$0xff]
    %v41 = vld [vmem:[%s0 + $0x48] sm:$0xff]
    %v42 = vld [vmem:[%s0 + $0x50] sm:$0xff]
    %v43 = vld [vmem:[%s0 + $0x58] sm:$0xff]
    %v44 = vld [vmem:[%s0 + $0x60] sm:$0xff]
    %v45 = vld [vmem:[%s0 + $0x68] sm:$0xff]
    %v46 = vld [vmem:[%s0 + $0x70] sm:$0xff]
    %v47 = vld [vmem:[%s0 + $0x78] sm:$0xff]
    %v48 = vld [vmem:[%s1] sm:$0xff]
    %v49 = vld [vmem:[%s1 + $0x8] sm:$0xff]
    %v50 = vld [vmem:[%s1 + $0x10] sm:$0xff]
    %v51 = vld [vmem:[%s1 + $0x18] sm:$0xff]
    %v52 = vld [vmem:[%s1 + $0x20] sm:$0xff]
    %v53 = vld [vmem:[%s1 + $0x28] sm:$0xff]
    %v54 = vld [vmem:[%s1 + $0x30] sm:$0xff]
    %v55 = vld [vmem:[%s1 + $0x38] sm:$0xff]
    %v56 = vld [vmem:[%s1 + $0x40] sm:$0xff]
    %v57 = vld [vmem:[%s1 + $0x48] sm:$0xff]
    %v58 = vld [vmem:[%s1 + $0x50] sm:$0xff]
    %v59 = vld [vmem:[%s1 + $0x58] sm:$0xff]
    %v60 = vld [vmem:[%s1 + $0x60] sm:$0xff]
    %v61 = vld [vmem:[%s1 + $0x68] sm:$0xff]
    %v62 = vld [vmem:[%s1 + $0x70] sm:$0xff]
    %v63 = vld [vmem:[%s1 + $0x78] sm:$0xff]
    %v64 = vld [vmem:[%s2] sm:$0xff]
    %v65 = vld [vmem:[%s2 + $0x8] sm:$0xff]
    %v66 = vld [vmem:[%s2 + $0x10] sm:$0xff]
    %v67 = vld [vmem:[%s2 + $0x18] sm:$0xff]
    %v68 = vld [vmem:[%s2 + $0x20] sm:$0xff]
    %v69 = vld [vmem:[%s2 + $0x28] sm:$0xff]
    %v70 = vld [vmem:[%s2 + $0x30] sm:$0xff]
    %v71 = vld [vmem:[%s2 + $0x38] sm:$0xff]
    %v72 = vld [vmem:[%s2 + $0x40] sm:$0xff]
    %v73 = vld [vmem:[%s2 + $0x48] sm:$0xff]
    %v74 = vld [vmem:[%s2 + $0x50] sm:$0xff]
    %v75 = vld [vmem:[%s2 + $0x58] sm:$0xff]
    %v76 = vld [vmem:[%s2 + $0x60] sm:$0xff]
    %v77 = vld [vmem:[%s2 + $0x68] sm:$0xff]
    %v78 = vld [vmem:[%s2 + $0x70] sm:$0xff]
    %v79 = vld [vmem:[%s2 + $0x78] sm:$0xff]
    %v80 = vld [vmem:[%s4] sm:$0xff]
    %v81 = vld [vmem:[%s4 + $0x8] sm:$0xff]
    %v82 = vld [vmem:[%s4 + $0x10] sm:$0xff]
    %v83 = vld [vmem:[%s4 + $0x18] sm:$0xff]
    %v84 = vld [vmem:[%s4 + $0x20] sm:$0xff]
    %v85 = vld [vmem:[%s4 + $0x28] sm:$0xff]
    %v86 = vld [vmem:[%s4 + $0x30] sm:$0xff]
    %v87 = vld [vmem:[%s4 + $0x38] sm:$0xff]
    %v88 = vld [vmem:[%s4 + $0x40] sm:$0xff]
    %v89 = vld [vmem:[%s4 + $0x48] sm:$0xff]
    %v90 = vld [vmem:[%s4 + $0x50] sm:$0xff]
    %v91 = vld [vmem:[%s4 + $0x58] sm:$0xff]
    %v92 = vld [vmem:[%s4 + $0x60] sm:$0xff]
    %v93 = vld [vmem:[%s4 + $0x68] sm:$0xff]
    %v94 = vld [vmem:[%s4 + $0x70] sm:$0xff]
    %v95 = vld [vmem:[%s4 + $0x78] sm:$0xff]
    %v96 = vadd.f32 %v48, %v80
    %v97 = vadd.f32 %v49, %v81
    %v98 = vadd.f32 %v50, %v82
    %v99 = vadd.f32 %v51, %v83
    %v100 = vadd.f32 %v52, %v84
    %v101 = vadd.f32 %v53, %v85
    %v102 = vadd.f32 %v54, %v86
    %v103 = vadd.f32 %v55, %v87
    %v104 = vadd.f32 %v56, %v88
    %v105 = vadd.f32 %v57, %v89
    %v106 = vadd.f32 %v58, %v90
    %v107 = vadd.f32 %v59, %v91
    %v108 = vadd.f32 %v60, %v92
    %v109 = vadd.f32 %v61, %v93
    %v110 = vadd.f32 %v62, %v94
    %v111 = vadd.f32 %v63, %v95
    %v112 = vpack.c.bf16 %v97, %v96
    %v113 = vpack.c.bf16 %v99, %v98
    %v114 = vpack.c.bf16 %v101, %v100
    %v115 = vpack.c.bf16 %v103, %v102
    %v116 = vpack.c.bf16 %v105, %v104
    %v117 = vpack.c.bf16 %v107, %v106
    %v118 = vpack.c.bf16 %v109, %v108
    %v119 = vpack.c.bf16 %v111, %v110
    %v120 = vld [vmem:[%s5] sm:$0xf]
    %v121 = vld [vmem:[%s5 + $0x4] sm:$0xf]
    %v122 = vld [vmem:[%s5 + $0x8] sm:$0xf]
    %v123 = vld [vmem:[%s5 + $0xc] sm:$0xf]
    %v128 = vunpack.c.l.b16 %v120
    %v129 = vunpack.c.l.b16 %v121
    %v130 = vunpack.c.l.b16 %v122
    %v131 = vunpack.c.l.b16 %v123
    %v132 = vpack.c.b16 %v129, %v128
    %v133 = vpack.c.b16 %v131, %v130
    %vm136 = vcmask 261120
    %v138 = vsel %vm136, %v112, 0
    %v141 = vsel %vm136, %v113, 0
    %v144 = vsel %vm136, %v114, 0
    %v147 = vsel %vm136, %v115, 0
    %v150 = vsel %vm136, %v116, 0
    %v153 = vsel %vm136, %v117, 0
    %v156 = vsel %vm136, %v118, 0
    %v159 = vsel %vm136, %v119, 0
    %161 = vmatprep.subr.bf16.mxu0 0
    %162 = vmatpush1.bf16.msra.mxu0 0
    %163 = vmatprep.subr.bf16.mxu0 0
    %164 = vmatpush1.bf16.msra.mxu0 0
    %165 = vmatprep.subr.bf16.mxu0 0
    %166 = vmatpush1.bf16.msra.mxu0 0
    %167 = vmatprep.subr.bf16.mxu0 0
    %168 = vmatpush1.bf16.msra.mxu0 0
    %169 = vmatprep.subr.bf16.mxu0 0
    %170 = vmatpush1.bf16.msra.mxu0 0
    %171 = vmatprep.subr.bf16.mxu0 0
    %172 = vmatpush1.bf16.msra.mxu0 0
    %173 = vmatprep.subr.bf16.mxu0 0
    %174 = vmatpush1.bf16.msra.mxu0 %v133
    %175 = vmatprep.subr.bf16.mxu0 0
    %176 = vmatpush1.bf16.msra.mxu0 %v132
    %177 = vmatprep.subr.bf16.mxu0 0
    %178 = vmatpush2.bf16.msra.mxu0 0
    %179 = vmatprep.subr.bf16.mxu0 0
    %180 = vmatpush2.bf16.msra.mxu0 0
    %181 = vmatprep.subr.bf16.mxu0 0
    %182 = vmatpush2.bf16.msra.mxu0 0
    %183 = vmatprep.subr.bf16.mxu0 0
    %184 = vmatpush2.bf16.msra.mxu0 0
    %185 = vmatprep.subr.bf16.mxu0 0
    %186 = vmatpush2.bf16.msra.mxu0 0
    %187 = vmatprep.subr.bf16.mxu0 0
    %188 = vmatpush2.bf16.msra.mxu0 0
    %189 = vmatprep.subr.bf16.mxu0 0
    %190 = vmatpush2.bf16.msra.mxu0 0
    %191 = vmatprep.subr.bf16.mxu0 0
    %192 = vmatpush2.bf16.msra.mxu0 0
    %193 = vmatprep.mubr.bf16.mxu0 0
    %194 = vmatmul.mubr.bf16.gmra.mxu0 %v138
    %v195 = vpop.f32.mrf.mxu0
    %v196 = vadd.f32 0.0, %v195
    %v197 = vpop.f32.mrf.mxu0
    %v198 = vpop.f32.mrf.mxu0
    %v199 = vadd.f32 0.0, %v198
    %v200 = vpop.f32.mrf.mxu0
    %201 = vmatprep.mubr.bf16.mxu0 0
    %202 = vmatmul.mubr.bf16.gmra.mxu0 %v141
    %v203 = vpop.f32.mrf.mxu0
    %v204 = vadd.f32 0.0, %v203
    %v205 = vpop.f32.mrf.mxu0
    %v206 = vpop.f32.mrf.mxu0
    %v207 = vadd.f32 0.0, %v206
    %v208 = vpop.f32.mrf.mxu0
    %209 = vmatprep.mubr.bf16.mxu0 0
    %210 = vmatmul.mubr.bf16.gmra.mxu0 %v144
    %v211 = vpop.f32.mrf.mxu0
    %v212 = vadd.f32 0.0, %v211
    %v213 = vpop.f32.mrf.mxu0
    %v214 = vpop.f32.mrf.mxu0
    %v215 = vadd.f32 0.0, %v214
    %v216 = vpop.f32.mrf.mxu0
    %217 = vmatprep.mubr.bf16.mxu0 0
    %218 = vmatmul.mubr.bf16.gmra.mxu0 %v147
    %v219 = vpop.f32.mrf.mxu0
    %v220 = vadd.f32 0.0, %v219
    %v221 = vpop.f32.mrf.mxu0
    %v222 = vpop.f32.mrf.mxu0
    %v223 = vadd.f32 0.0, %v222
    %v224 = vpop.f32.mrf.mxu0
    %225 = vmatprep.mubr.bf16.mxu0 0
    %226 = vmatmul.mubr.bf16.gmra.mxu0 %v150
    %v227 = vpop.f32.mrf.mxu0
    %v228 = vadd.f32 0.0, %v227
    %v229 = vpop.f32.mrf.mxu0
    %v230 = vpop.f32.mrf.mxu0
    %v231 = vadd.f32 0.0, %v230
    %v232 = vpop.f32.mrf.mxu0
    %233 = vmatprep.mubr.bf16.mxu0 0
    %234 = vmatmul.mubr.bf16.gmra.mxu0 %v153
    %v235 = vpop.f32.mrf.mxu0
    %v236 = vadd.f32 0.0, %v235
    %v237 = vpop.f32.mrf.mxu0
    %v238 = vpop.f32.mrf.mxu0
    %v239 = vadd.f32 0.0, %v238
    %v240 = vpop.f32.mrf.mxu0
    %241 = vmatprep.mubr.bf16.mxu0 0
    %242 = vmatmul.mubr.bf16.gmra.mxu0 %v156
    %v243 = vpop.f32.mrf.mxu0
    %v244 = vadd.f32 0.0, %v243
    %v245 = vpop.f32.mrf.mxu0
    %v246 = vpop.f32.mrf.mxu0
    %v247 = vadd.f32 0.0, %v246
    %v248 = vpop.f32.mrf.mxu0
    %249 = vmatprep.mubr.bf16.mxu0 0
    %250 = vmatmul.mubr.bf16.gmra.mxu0 %v159
    %v251 = vpop.f32.mrf.mxu0
    %v252 = vadd.f32 0.0, %v251
    %v253 = vpop.f32.mrf.mxu0
    %v254 = vpop.f32.mrf.mxu0
    %v255 = vadd.f32 0.0, %v254
    %v256 = vpop.f32.mrf.mxu0
    %257 = vdwg.mxu0
    %v258 = vpack.c.bf16 %v199, %v196
    %v259 = vpack.c.bf16 %v207, %v204
    %v260 = vpack.c.bf16 %v215, %v212
    %v261 = vpack.c.bf16 %v223, %v220
    %v262 = vpack.c.bf16 %v231, %v228
    %v263 = vpack.c.bf16 %v239, %v236
    %v264 = vpack.c.bf16 %v247, %v244
    %v265 = vpack.c.bf16 %v255, %v252
    %v266 = vtanh.pop %v196
    %v267 = vtanh.pop %v199
    %v268 = vtanh.pop %v204
    %v269 = vtanh.pop %v207
    %v270 = vtanh.pop %v212
    %v271 = vtanh.pop %v215
    %v272 = vtanh.pop %v220
    %v273 = vtanh.pop %v223
    %v274 = vtanh.pop %v228
    %v275 = vtanh.pop %v231
    %v276 = vtanh.pop %v236
    %v277 = vtanh.pop %v239
    %v278 = vtanh.pop %v244
    %v279 = vtanh.pop %v247
    %v280 = vtanh.pop %v252
    %v281 = vtanh.pop %v255
    %v282 = vld [vmem:[%s3] sm:$0xff]
    %v283 = vld [vmem:[%s3 + $0x8] sm:$0xff]
    %v284 = vld [vmem:[%s3 + $0x10] sm:$0xff]
    %v285 = vld [vmem:[%s3 + $0x18] sm:$0xff]
    %v286 = vld [vmem:[%s3 + $0x20] sm:$0xff]
    %v287 = vld [vmem:[%s3 + $0x28] sm:$0xff]
    %v288 = vld [vmem:[%s3 + $0x30] sm:$0xff]
    %v289 = vld [vmem:[%s3 + $0x38] sm:$0xff]
    %v290 = vld [vmem:[%s3 + $0x40] sm:$0xff]
    %v291 = vld [vmem:[%s3 + $0x48] sm:$0xff]
    %v292 = vld [vmem:[%s3 + $0x50] sm:$0xff]
    %v293 = vld [vmem:[%s3 + $0x58] sm:$0xff]
    %v294 = vld [vmem:[%s3 + $0x60] sm:$0xff]
    %v295 = vld [vmem:[%s3 + $0x68] sm:$0xff]
    %v296 = vld [vmem:[%s3 + $0x70] sm:$0xff]
    %v297 = vld [vmem:[%s3 + $0x78] sm:$0xff]
    %v299 = vsel %vm136, %v258, 0
    %v302 = vsel %vm136, %v259, 0
    %v305 = vsel %vm136, %v260, 0
    %v308 = vsel %vm136, %v261, 0
    %v311 = vsel %vm136, %v262, 0
    %v314 = vsel %vm136, %v263, 0
    %v317 = vsel %vm136, %v264, 0
    %v320 = vsel %vm136, %v265, 0
    %322 = vmatprep.subr.bf16.mxu0 0
    %323 = vmatpush1.bf16.xpose.msra.mxu0 %v159
    %324 = vmatprep.subr.bf16.mxu0 0
    %325 = vmatpush1.bf16.xpose.msra.mxu0 %v156
    %326 = vmatprep.subr.bf16.mxu0 0
    %327 = vmatpush1.bf16.xpose.msra.mxu0 %v153
    %328 = vmatprep.subr.bf16.mxu0 0
    %329 = vmatpush1.bf16.xpose.msra.mxu0 %v150
    %330 = vmatprep.subr.bf16.mxu0 0
    %331 = vmatpush1.bf16.xpose.msra.mxu0 %v147
    %332 = vmatprep.subr.bf16.mxu0 0
    %333 = vmatpush1.bf16.xpose.msra.mxu0 %v144
    %334 = vmatprep.subr.bf16.mxu0 0
    %335 = vmatpush1.bf16.xpose.msra.mxu0 %v141
    %336 = vmatprep.subr.bf16.mxu0 0
    %337 = vmatpush1.bf16.xpose.msra.mxu0 %v138
    %338 = vmatprep.subr.bf16.mxu0 0
    %339 = vmatpush2.bf16.xpose.msra.mxu0 0
    %340 = vmatprep.subr.bf16.mxu0 0
    %341 = vmatpush2.bf16.xpose.msra.mxu0 0
    %342 = vmatprep.subr.bf16.mxu0 0
    %343 = vmatpush2.bf16.xpose.msra.mxu0 0
    %344 = vmatprep.subr.bf16.mxu0 0
    %345 = vmatpush2.bf16.xpose.msra.mxu0 0
    %346 = vmatprep.subr.bf16.mxu0 0
    %347 = vmatpush2.bf16.xpose.msra.mxu0 0
    %348 = vmatprep.subr.bf16.mxu0 0
    %349 = vmatpush2.bf16.xpose.msra.mxu0 0
    %350 = vmatprep.subr.bf16.mxu0 0
    %351 = vmatpush2.bf16.xpose.msra.mxu0 0
    %352 = vmatprep.subr.bf16.mxu0 0
    %353 = vmatpush2.bf16.xpose.msra.mxu0 0
    %354 = vmatprep.mubr.bf16.mxu0 0
    %355 = vmatmul.mubr.bf16.gmra.mxu0 %v299
    %v356 = vpop.f32.mrf.mxu0
    %v357 = vadd.f32 %v282, %v356
    %v358 = vpop.f32.mrf.mxu0
    %v359 = vpop.f32.mrf.mxu0
    %v360 = vadd.f32 %v283, %v359
    %v361 = vpop.f32.mrf.mxu0
    %362 = vmatprep.mubr.bf16.mxu0 0
    %363 = vmatmul.mubr.bf16.gmra.mxu0 %v302
    %v364 = vpop.f32.mrf.mxu0
    %v365 = vadd.f32 %v284, %v364
    %v366 = vpop.f32.mrf.mxu0
    %v367 = vpop.f32.mrf.mxu0
    %v368 = vadd.f32 %v285, %v367
    %v369 = vpop.f32.mrf.mxu0
    %370 = vmatprep.mubr.bf16.mxu0 0
    %371 = vmatmul.mubr.bf16.gmra.mxu0 %v305
    %v372 = vpop.f32.mrf.mxu0
    %v373 = vadd.f32 %v286, %v372
    %v374 = vpop.f32.mrf.mxu0
    %v375 = vpop.f32.mrf.mxu0
    %v376 = vadd.f32 %v287, %v375
    %v377 = vpop.f32.mrf.mxu0
    %378 = vmatprep.mubr.bf16.mxu0 0
    %379 = vmatmul.mubr.bf16.gmra.mxu0 %v308
    %v380 = vpop.f32.mrf.mxu0
    %v381 = vadd.f32 %v288, %v380
    %v382 = vpop.f32.mrf.mxu0
    %v383 = vpop.f32.mrf.mxu0
    %v384 = vadd.f32 %v289, %v383
    %v385 = vpop.f32.mrf.mxu0
    %386 = vmatprep.mubr.bf16.mxu0 0
    %387 = vmatmul.mubr.bf16.gmra.mxu0 %v311
    %v388 = vpop.f32.mrf.mxu0
    %v389 = vadd.f32 %v290, %v388
    %v390 = vpop.f32.mrf.mxu0
    %v391 = vpop.f32.mrf.mxu0
    %v392 = vadd.f32 %v291, %v391
    %v393 = vpop.f32.mrf.mxu0
    %394 = vmatprep.mubr.bf16.mxu0 0
    %395 = vmatmul.mubr.bf16.gmra.mxu0 %v314
    %v396 = vpop.f32.mrf.mxu0
    %v397 = vadd.f32 %v292, %v396
    %v398 = vpop.f32.mrf.mxu0
    %v399 = vpop.f32.mrf.mxu0
    %v400 = vadd.f32 %v293, %v399
    %v401 = vpop.f32.mrf.mxu0
    %402 = vmatprep.mubr.bf16.mxu0 0
    %403 = vmatmul.mubr.bf16.gmra.mxu0 %v317
    %v404 = vpop.f32.mrf.mxu0
    %v405 = vadd.f32 %v294, %v404
    %v406 = vpop.f32.mrf.mxu0
    %v407 = vpop.f32.mrf.mxu0
    %v408 = vadd.f32 %v295, %v407
    %v409 = vpop.f32.mrf.mxu0
    %410 = vmatprep.mubr.bf16.mxu0 0
    %411 = vmatmul.mubr.bf16.gmra.mxu0 %v320
    %v412 = vpop.f32.mrf.mxu0
    %v413 = vadd.f32 %v296, %v412
    %v414 = vpop.f32.mrf.mxu0
    %v415 = vpop.f32.mrf.mxu0
    %v416 = vadd.f32 %v297, %v415
    %v417 = vpop.f32.mrf.mxu0
    %418 = vdwg.mxu0
    %vm419 = vcmp.gt.f32.partialorder %v64, 0.0
    %vm420 = vcmp.gt.f32.partialorder %v65, 0.0
    %vm421 = vcmp.gt.f32.partialorder %v66, 0.0
    %vm422 = vcmp.gt.f32.partialorder %v67, 0.0
    %vm423 = vcmp.gt.f32.partialorder %v68, 0.0
    %vm424 = vcmp.gt.f32.partialorder %v69, 0.0
    %vm425 = vcmp.gt.f32.partialorder %v70, 0.0
    %vm426 = vcmp.gt.f32.partialorder %v71, 0.0
    %vm427 = vcmp.gt.f32.partialorder %v72, 0.0
    %vm428 = vcmp.gt.f32.partialorder %v73, 0.0
    %vm429 = vcmp.gt.f32.partialorder %v74, 0.0
    %vm430 = vcmp.gt.f32.partialorder %v75, 0.0
    %vm431 = vcmp.gt.f32.partialorder %v76, 0.0
    %vm432 = vcmp.gt.f32.partialorder %v77, 0.0
    %vm433 = vcmp.gt.f32.partialorder %v78, 0.0
    %vm434 = vcmp.gt.f32.partialorder %v79, 0.0
    %v435 = vsel %vm419, %v357, -1e+30
    %v436 = vsel %vm420, %v360, -1e+30
    %v437 = vsel %vm421, %v365, -1e+30
    %v438 = vsel %vm422, %v368, -1e+30
    %v439 = vsel %vm423, %v373, -1e+30
    %v440 = vsel %vm424, %v376, -1e+30
    %v441 = vsel %vm425, %v381, -1e+30
    %v442 = vsel %vm426, %v384, -1e+30
    %v443 = vsel %vm427, %v389, -1e+30
    %v444 = vsel %vm428, %v392, -1e+30
    %v445 = vsel %vm429, %v397, -1e+30
    %v446 = vsel %vm430, %v400, -1e+30
    %v447 = vsel %vm431, %v405, -1e+30
    %v448 = vsel %vm432, %v408, -1e+30
    %v449 = vsel %vm433, %v413, -1e+30
    %v450 = vsel %vm434, %v416, -1e+30
    %451 = vmax.xlane.f32.xlu0 %v435
    %v452 = vpop.xlane.xlu0 %451
    %453 = vmax.xlane.f32.xlu0 %v436
    %v454 = vpop.xlane.xlu0 %453
    %455 = vmax.xlane.f32.xlu0 %v437
    %v456 = vpop.xlane.xlu0 %455
    %457 = vmax.xlane.f32.xlu0 %v438
    %v458 = vpop.xlane.xlu0 %457
    %459 = vmax.xlane.f32.xlu0 %v439
    %v460 = vpop.xlane.xlu0 %459
    %461 = vmax.xlane.f32.xlu0 %v440
    %v462 = vpop.xlane.xlu0 %461
    %463 = vmax.xlane.f32.xlu0 %v441
    %v464 = vpop.xlane.xlu0 %463
    %465 = vmax.xlane.f32.xlu0 %v442
    %v466 = vpop.xlane.xlu0 %465
    %467 = vmax.xlane.f32.xlu0 %v443
    %v468 = vpop.xlane.xlu0 %467
    %469 = vmax.xlane.f32.xlu0 %v444
    %v470 = vpop.xlane.xlu0 %469
    %471 = vmax.xlane.f32.xlu0 %v445
    %v472 = vpop.xlane.xlu0 %471
    %473 = vmax.xlane.f32.xlu0 %v446
    %v474 = vpop.xlane.xlu0 %473
    %475 = vmax.xlane.f32.xlu0 %v447
    %v476 = vpop.xlane.xlu0 %475
    %477 = vmax.xlane.f32.xlu0 %v448
    %v478 = vpop.xlane.xlu0 %477
    %479 = vmax.xlane.f32.xlu0 %v449
    %v480 = vpop.xlane.xlu0 %479
    %481 = vmax.xlane.f32.xlu0 %v450
    %v482 = vpop.xlane.xlu0 %481
    %v483 = vsub.f32 %v435, %v452
    %v484 = vsub.f32 %v436, %v454
    %v485 = vsub.f32 %v437, %v456
    %v486 = vsub.f32 %v438, %v458
    %v487 = vsub.f32 %v439, %v460
    %v488 = vsub.f32 %v440, %v462
    %v489 = vsub.f32 %v441, %v464
    %v490 = vsub.f32 %v442, %v466
    %v491 = vsub.f32 %v443, %v468
    %v492 = vsub.f32 %v444, %v470
    %v493 = vsub.f32 %v445, %v472
    %v494 = vsub.f32 %v446, %v474
    %v495 = vsub.f32 %v447, %v476
    %v496 = vsub.f32 %v448, %v478
    %v497 = vsub.f32 %v449, %v480
    %v498 = vsub.f32 %v450, %v482
    %v499 = vmul.f32 %v483, 1.442695
    %v500 = vpow.pop %v499
    %v501 = vmul.f32 %v484, 1.442695
    %v502 = vpow.pop %v501
    %v503 = vmul.f32 %v485, 1.442695
    %v504 = vpow.pop %v503
    %v505 = vmul.f32 %v486, 1.442695
    %v506 = vpow.pop %v505
    %v507 = vmul.f32 %v487, 1.442695
    %v508 = vpow.pop %v507
    %v509 = vmul.f32 %v488, 1.442695
    %v510 = vpow.pop %v509
    %v511 = vmul.f32 %v489, 1.442695
    %v512 = vpow.pop %v511
    %v513 = vmul.f32 %v490, 1.442695
    %v514 = vpow.pop %v513
    %v515 = vmul.f32 %v491, 1.442695
    %v516 = vpow.pop %v515
    %v517 = vmul.f32 %v492, 1.442695
    %v518 = vpow.pop %v517
    %v519 = vmul.f32 %v493, 1.442695
    %v520 = vpow.pop %v519
    %v521 = vmul.f32 %v494, 1.442695
    %v522 = vpow.pop %v521
    %v523 = vmul.f32 %v495, 1.442695
    %v524 = vpow.pop %v523
    %v525 = vmul.f32 %v496, 1.442695
    %v526 = vpow.pop %v525
    %v527 = vmul.f32 %v497, 1.442695
    %v528 = vpow.pop %v527
    %v529 = vmul.f32 %v498, 1.442695
    %v530 = vpow.pop %v529
    %v531 = vsel %vm419, %v500, 0.0
    %v532 = vsel %vm420, %v502, 0.0
    %v533 = vsel %vm421, %v504, 0.0
    %v534 = vsel %vm422, %v506, 0.0
    %v535 = vsel %vm423, %v508, 0.0
    %v536 = vsel %vm424, %v510, 0.0
    %v537 = vsel %vm425, %v512, 0.0
    %v538 = vsel %vm426, %v514, 0.0
    %v539 = vsel %vm427, %v516, 0.0
    %v540 = vsel %vm428, %v518, 0.0
    %v541 = vsel %vm429, %v520, 0.0
    %v542 = vsel %vm430, %v522, 0.0
    %v543 = vsel %vm431, %v524, 0.0
    %v544 = vsel %vm432, %v526, 0.0
    %v545 = vsel %vm433, %v528, 0.0
    %v546 = vsel %vm434, %v530, 0.0
    %547 = vadd.xlane.f32.xlu0 %v531
    %v548 = vpop.xlane.xlu0 %547
    %549 = vadd.xlane.f32.xlu0 %v532
    %v550 = vpop.xlane.xlu0 %549
    %551 = vadd.xlane.f32.xlu0 %v533
    %v552 = vpop.xlane.xlu0 %551
    %553 = vadd.xlane.f32.xlu0 %v534
    %v554 = vpop.xlane.xlu0 %553
    %555 = vadd.xlane.f32.xlu0 %v535
    %v556 = vpop.xlane.xlu0 %555
    %557 = vadd.xlane.f32.xlu0 %v536
    %v558 = vpop.xlane.xlu0 %557
    %559 = vadd.xlane.f32.xlu0 %v537
    %v560 = vpop.xlane.xlu0 %559
    %561 = vadd.xlane.f32.xlu0 %v538
    %v562 = vpop.xlane.xlu0 %561
    %563 = vadd.xlane.f32.xlu0 %v539
    %v564 = vpop.xlane.xlu0 %563
    %565 = vadd.xlane.f32.xlu0 %v540
    %v566 = vpop.xlane.xlu0 %565
    %567 = vadd.xlane.f32.xlu0 %v541
    %v568 = vpop.xlane.xlu0 %567
    %569 = vadd.xlane.f32.xlu0 %v542
    %v570 = vpop.xlane.xlu0 %569
    %571 = vadd.xlane.f32.xlu0 %v543
    %v572 = vpop.xlane.xlu0 %571
    %573 = vadd.xlane.f32.xlu0 %v544
    %v574 = vpop.xlane.xlu0 %573
    %575 = vadd.xlane.f32.xlu0 %v545
    %v576 = vpop.xlane.xlu0 %575
    %577 = vadd.xlane.f32.xlu0 %v546
    %v578 = vpop.xlane.xlu0 %577
    %v579 = vadd.f32 %v548, 1e-09
    %v580 = vadd.f32 %v550, 1e-09
    %v581 = vadd.f32 %v552, 1e-09
    %v582 = vadd.f32 %v554, 1e-09
    %v583 = vadd.f32 %v556, 1e-09
    %v584 = vadd.f32 %v558, 1e-09
    %v585 = vadd.f32 %v560, 1e-09
    %v586 = vadd.f32 %v562, 1e-09
    %v587 = vadd.f32 %v564, 1e-09
    %v588 = vadd.f32 %v566, 1e-09
    %v589 = vadd.f32 %v568, 1e-09
    %v590 = vadd.f32 %v570, 1e-09
    %v591 = vadd.f32 %v572, 1e-09
    %v592 = vadd.f32 %v574, 1e-09
    %v593 = vadd.f32 %v576, 1e-09
    %v594 = vadd.f32 %v578, 1e-09
    %v595 = vrcp.pop %v579
    %v596 = vmul.f32 %v531, %v595
    %v597 = vrcp.pop %v580
    %v598 = vmul.f32 %v532, %v597
    %v599 = vrcp.pop %v581
    %v600 = vmul.f32 %v533, %v599
    %v601 = vrcp.pop %v582
    %v602 = vmul.f32 %v534, %v601
    %v603 = vrcp.pop %v583
    %v604 = vmul.f32 %v535, %v603
    %v605 = vrcp.pop %v584
    %v606 = vmul.f32 %v536, %v605
    %v607 = vrcp.pop %v585
    %v608 = vmul.f32 %v537, %v607
    %v609 = vrcp.pop %v586
    %v610 = vmul.f32 %v538, %v609
    %v611 = vrcp.pop %v587
    %v612 = vmul.f32 %v539, %v611
    %v613 = vrcp.pop %v588
    %v614 = vmul.f32 %v540, %v613
    %v615 = vrcp.pop %v589
    %v616 = vmul.f32 %v541, %v615
    %v617 = vrcp.pop %v590
    %v618 = vmul.f32 %v542, %v617
    %v619 = vrcp.pop %v591
    %v620 = vmul.f32 %v543, %v619
    %v621 = vrcp.pop %v592
    %v622 = vmul.f32 %v544, %v621
    %v623 = vrcp.pop %v593
    %v624 = vmul.f32 %v545, %v623
    %v625 = vrcp.pop %v594
    %v626 = vmul.f32 %v546, %v625
    %628 = vset.pattern.permute.xlu0 0
    %629 = vperm.xlu0 %628, %v32
    %v630 = vpop.permute.xlu0 %629
    %633 = vset.pattern.permute.xlu0 0
    %634 = vperm.xlu0 %633, %v33
    %v635 = vpop.permute.xlu0 %634
    %638 = vset.pattern.permute.xlu0 0
    %639 = vperm.xlu0 %638, %v34
    %v640 = vpop.permute.xlu0 %639
    %643 = vset.pattern.permute.xlu0 0
    %644 = vperm.xlu0 %643, %v35
    %v645 = vpop.permute.xlu0 %644
    %648 = vset.pattern.permute.xlu0 0
    %649 = vperm.xlu0 %648, %v36
    %v650 = vpop.permute.xlu0 %649
    %653 = vset.pattern.permute.xlu0 0
    %654 = vperm.xlu0 %653, %v37
    %v655 = vpop.permute.xlu0 %654
    %658 = vset.pattern.permute.xlu0 0
    %659 = vperm.xlu0 %658, %v38
    %v660 = vpop.permute.xlu0 %659
    %663 = vset.pattern.permute.xlu0 0
    %664 = vperm.xlu0 %663, %v39
    %v665 = vpop.permute.xlu0 %664
    %668 = vset.pattern.permute.xlu0 0
    %669 = vperm.xlu0 %668, %v40
    %v670 = vpop.permute.xlu0 %669
    %673 = vset.pattern.permute.xlu0 0
    %674 = vperm.xlu0 %673, %v41
    %v675 = vpop.permute.xlu0 %674
    %678 = vset.pattern.permute.xlu0 0
    %679 = vperm.xlu0 %678, %v42
    %v680 = vpop.permute.xlu0 %679
    %683 = vset.pattern.permute.xlu0 0
    %684 = vperm.xlu0 %683, %v43
    %v685 = vpop.permute.xlu0 %684
    %688 = vset.pattern.permute.xlu0 0
    %689 = vperm.xlu0 %688, %v44
    %v690 = vpop.permute.xlu0 %689
    %693 = vset.pattern.permute.xlu0 0
    %694 = vperm.xlu0 %693, %v45
    %v695 = vpop.permute.xlu0 %694
    %698 = vset.pattern.permute.xlu0 0
    %699 = vperm.xlu0 %698, %v46
    %v700 = vpop.permute.xlu0 %699
    %703 = vset.pattern.permute.xlu0 0
    %704 = vperm.xlu0 %703, %v47
    %v705 = vpop.permute.xlu0 %704
    %v707 = vmul.f32 %v596, %v630
    %v708 = vmul.f32 %v598, %v635
    %v709 = vmul.f32 %v600, %v640
    %v710 = vmul.f32 %v602, %v645
    %v711 = vmul.f32 %v604, %v650
    %v712 = vmul.f32 %v606, %v655
    %v713 = vmul.f32 %v608, %v660
    %v714 = vmul.f32 %v610, %v665
    %v715 = vmul.f32 %v612, %v670
    %v716 = vmul.f32 %v614, %v675
    %v717 = vmul.f32 %v616, %v680
    %v718 = vmul.f32 %v618, %v685
    %v719 = vmul.f32 %v620, %v690
    %v720 = vmul.f32 %v622, %v695
    %v721 = vmul.f32 %v624, %v700
    %v722 = vmul.f32 %v626, %v705
    %v723 = vadd.f32 %v707, %v708
    %v724 = vadd.f32 %v723, %v709
    %v725 = vadd.f32 %v724, %v710
    %v726 = vadd.f32 %v725, %v711
    %v727 = vadd.f32 %v726, %v712
    %v728 = vadd.f32 %v727, %v713
    %v729 = vadd.f32 %v728, %v714
    %v730 = vadd.f32 %v729, %v715
    %v731 = vadd.f32 %v730, %v716
    %v732 = vadd.f32 %v731, %v717
    %v733 = vadd.f32 %v732, %v718
    %v734 = vadd.f32 %v733, %v719
    %v735 = vadd.f32 %v734, %v720
    %v736 = vadd.f32 %v735, %v721
    %v737 = vadd.f32 %v736, %v722
    %v738 = vrot.slane %v737, 4
    %v739 = vadd.f32 %v737, %v738
    %v740 = vrot.slane %v739, 2
    %v741 = vadd.f32 %v739, %v740
    %v742 = vrot.slane %v741, 1
    %v743 = vadd.f32 %v741, %v742
    %v744 = vpack.c.bf16 %v708, %v707
    %v745 = vpack.c.bf16 %v710, %v709
    %v746 = vpack.c.bf16 %v712, %v711
    %v747 = vpack.c.bf16 %v714, %v713
    %v748 = vpack.c.bf16 %v716, %v715
    %v749 = vpack.c.bf16 %v718, %v717
    %v750 = vpack.c.bf16 %v720, %v719
    %v751 = vpack.c.bf16 %v722, %v721
    %v752 = vpack.c.bf16 %v267, %v266
    %v753 = vpack.c.bf16 %v269, %v268
    %v754 = vpack.c.bf16 %v271, %v270
    %v755 = vpack.c.bf16 %v273, %v272
    %v756 = vpack.c.bf16 %v275, %v274
    %v757 = vpack.c.bf16 %v277, %v276
    %v758 = vpack.c.bf16 %v279, %v278
    %v759 = vpack.c.bf16 %v281, %v280
    %760 = vxpose.xlu0.c.b16.start [1/8] %v744, 128
    %761 = vxpose.xlu0.c.b16.cont [2/8] %v745, 128
    %762 = vxpose.xlu0.c.b16.cont [3/8] %v746, 128
    %763 = vxpose.xlu0.c.b16.cont [4/8] %v747, 128
    %764 = vxpose.xlu0.c.b16.cont [5/8] %v748, 128
    %765 = vxpose.xlu0.c.b16.cont [6/8] %v749, 128
    %766 = vxpose.xlu0.c.b16.cont [7/8] %v750, 128
    %767 = vxpose.xlu0.c.b16.end [8/8] %v751, 128
    %v768 = vpop.trf.xlu0
    %v769 = vpop.trf.xlu0
    %v770 = vpop.trf.xlu0
    %v771 = vpop.trf.xlu0
    %v772 = vpop.trf.xlu0
    %v773 = vpop.trf.xlu0
    %v774 = vpop.trf.xlu0
    %v775 = vpop.trf.xlu0
    %784 = vrot.lane.b32.xlu0 %v752, 96
    %v785 = vpop.permute.xlu0 %784
    %786 = vrot.lane.b32.xlu0 %v753, 96
    %v787 = vpop.permute.xlu0 %786
    %788 = vrot.lane.b32.xlu0 %v754, 96
    %v789 = vpop.permute.xlu0 %788
    %790 = vrot.lane.b32.xlu0 %v755, 96
    %v791 = vpop.permute.xlu0 %790
    %792 = vrot.lane.b32.xlu0 %v756, 96
    %v793 = vpop.permute.xlu0 %792
    %794 = vrot.lane.b32.xlu0 %v757, 96
    %v795 = vpop.permute.xlu0 %794
    %796 = vrot.lane.b32.xlu0 %v758, 96
    %v797 = vpop.permute.xlu0 %796
    %798 = vrot.lane.b32.xlu0 %v759, 96
    %v799 = vpop.permute.xlu0 %798
    %808 = vmatprep.subr.bf16.mxu0 0
    %809 = vmatpush1.bf16.msra.mxu0 %v799
    %810 = vmatprep.subr.bf16.mxu0 0
    %811 = vmatpush1.bf16.msra.mxu0 %v797
    %812 = vmatprep.subr.bf16.mxu0 0
    %813 = vmatpush1.bf16.msra.mxu0 %v795
    %814 = vmatprep.subr.bf16.mxu0 0
    %815 = vmatpush1.bf16.msra.mxu0 %v793
    %816 = vmatprep.subr.bf16.mxu0 0
    %817 = vmatpush1.bf16.msra.mxu0 %v791
    %818 = vmatprep.subr.bf16.mxu0 0
    %819 = vmatpush1.bf16.msra.mxu0 %v789
    %820 = vmatprep.subr.bf16.mxu0 0
    %821 = vmatpush1.bf16.msra.mxu0 %v787
    %822 = vmatprep.subr.bf16.mxu0 0
    %823 = vmatpush1.bf16.msra.mxu0 %v785
    %824 = vmatprep.subr.bf16.mxu0 0
    %825 = vmatpush2.bf16.msra.mxu0 0
    %826 = vmatprep.subr.bf16.mxu0 0
    %827 = vmatpush2.bf16.msra.mxu0 0
    %828 = vmatprep.subr.bf16.mxu0 0
    %829 = vmatpush2.bf16.msra.mxu0 0
    %830 = vmatprep.subr.bf16.mxu0 0
    %831 = vmatpush2.bf16.msra.mxu0 0
    %832 = vmatprep.subr.bf16.mxu0 0
    %833 = vmatpush2.bf16.msra.mxu0 0
    %834 = vmatprep.subr.bf16.mxu0 0
    %835 = vmatpush2.bf16.msra.mxu0 0
    %836 = vmatprep.subr.bf16.mxu0 0
    %837 = vmatpush2.bf16.msra.mxu0 0
    %838 = vmatprep.subr.bf16.mxu0 0
    %839 = vmatpush2.bf16.msra.mxu0 0
    %840 = vmatprep.mubr.bf16.mxu0 0
    %841 = vmatmul.mubr.bf16.gmra.mxu0 %v768
    %v842 = vpop.f32.mrf.mxu0
    %v843 = vadd.f32 0.0, %v842
    %v844 = vpop.f32.mrf.mxu0
    %v845 = vpop.f32.mrf.mxu0
    %v846 = vadd.f32 0.0, %v845
    %v847 = vpop.f32.mrf.mxu0
    %848 = vmatprep.mubr.bf16.mxu0 0
    %849 = vmatmul.mubr.bf16.gmra.mxu0 %v769
    %v850 = vpop.f32.mrf.mxu0
    %v851 = vadd.f32 0.0, %v850
    %v852 = vpop.f32.mrf.mxu0
    %v853 = vpop.f32.mrf.mxu0
    %v854 = vadd.f32 0.0, %v853
    %v855 = vpop.f32.mrf.mxu0
    %856 = vmatprep.mubr.bf16.mxu0 0
    %857 = vmatmul.mubr.bf16.gmra.mxu0 %v770
    %v858 = vpop.f32.mrf.mxu0
    %v859 = vadd.f32 0.0, %v858
    %v860 = vpop.f32.mrf.mxu0
    %v861 = vpop.f32.mrf.mxu0
    %v862 = vadd.f32 0.0, %v861
    %v863 = vpop.f32.mrf.mxu0
    %864 = vmatprep.mubr.bf16.mxu0 0
    %865 = vmatmul.mubr.bf16.gmra.mxu0 %v771
    %v866 = vpop.f32.mrf.mxu0
    %v867 = vadd.f32 0.0, %v866
    %v868 = vpop.f32.mrf.mxu0
    %v869 = vpop.f32.mrf.mxu0
    %v870 = vadd.f32 0.0, %v869
    %v871 = vpop.f32.mrf.mxu0
    %872 = vmatprep.mubr.bf16.mxu0 0
    %873 = vmatmul.mubr.bf16.gmra.mxu0 %v772
    %v874 = vpop.f32.mrf.mxu0
    %v875 = vadd.f32 0.0, %v874
    %v876 = vpop.f32.mrf.mxu0
    %v877 = vpop.f32.mrf.mxu0
    %v878 = vadd.f32 0.0, %v877
    %v879 = vpop.f32.mrf.mxu0
    %880 = vmatprep.mubr.bf16.mxu0 0
    %881 = vmatmul.mubr.bf16.gmra.mxu0 %v773
    %v882 = vpop.f32.mrf.mxu0
    %v883 = vadd.f32 0.0, %v882
    %v884 = vpop.f32.mrf.mxu0
    %v885 = vpop.f32.mrf.mxu0
    %v886 = vadd.f32 0.0, %v885
    %v887 = vpop.f32.mrf.mxu0
    %888 = vmatprep.mubr.bf16.mxu0 0
    %889 = vmatmul.mubr.bf16.gmra.mxu0 %v774
    %v890 = vpop.f32.mrf.mxu0
    %v891 = vadd.f32 0.0, %v890
    %v892 = vpop.f32.mrf.mxu0
    %v893 = vpop.f32.mrf.mxu0
    %v894 = vadd.f32 0.0, %v893
    %v895 = vpop.f32.mrf.mxu0
    %896 = vmatprep.mubr.bf16.mxu0 0
    %897 = vmatmul.mubr.bf16.gmra.mxu0 %v775
    %v898 = vpop.f32.mrf.mxu0
    %v899 = vadd.f32 0.0, %v898
    %v900 = vpop.f32.mrf.mxu0
    %v901 = vpop.f32.mrf.mxu0
    %v902 = vadd.f32 0.0, %v901
    %v903 = vpop.f32.mrf.mxu0
    %904 = vdwg.mxu0
    %v905 = vadd.f32 %v48, %v843
    %v906 = vadd.f32 %v49, %v846
    %v907 = vadd.f32 %v50, %v851
    %v908 = vadd.f32 %v51, %v854
    %v909 = vadd.f32 %v52, %v859
    %v910 = vadd.f32 %v53, %v862
    %v911 = vadd.f32 %v54, %v867
    %v912 = vadd.f32 %v55, %v870
    %v913 = vadd.f32 %v56, %v875
    %v914 = vadd.f32 %v57, %v878
    %v915 = vadd.f32 %v58, %v883
    %v916 = vadd.f32 %v59, %v886
    %v917 = vadd.f32 %v60, %v891
    %v918 = vadd.f32 %v61, %v894
    %v919 = vadd.f32 %v62, %v899
    %v920 = vadd.f32 %v63, %v902
    %v921 = vld [vmem:[%s6] sm:$0x1]
    %v923 = vlaneseq
    %v924 = vshrl.u32 %v923, 7
    %v925 = vsub.s32 0, %v924
    %v926 = vrot.slane %v921, %v925
    %v928 = vadd.f32 %v905, %v926
    %v929 = vadd.f32 %v906, %v926
    %v930 = vadd.f32 %v907, %v926
    %v931 = vadd.f32 %v908, %v926
    %v932 = vadd.f32 %v909, %v926
    %v933 = vadd.f32 %v910, %v926
    %v934 = vadd.f32 %v911, %v926
    %v935 = vadd.f32 %v912, %v926
    %v936 = vadd.f32 %v913, %v926
    %v937 = vadd.f32 %v914, %v926
    %v938 = vadd.f32 %v915, %v926
    %v939 = vadd.f32 %v916, %v926
    %v940 = vadd.f32 %v917, %v926
    %v941 = vadd.f32 %v918, %v926
    %v942 = vadd.f32 %v919, %v926
    %v943 = vadd.f32 %v920, %v926
    %v944 = vtanh.pop %v928
    %v945 = vtanh.pop %v929
    %v946 = vtanh.pop %v930
    %v947 = vtanh.pop %v931
    %v948 = vtanh.pop %v932
    %v949 = vtanh.pop %v933
    %v950 = vtanh.pop %v934
    %v951 = vtanh.pop %v935
    %v952 = vtanh.pop %v936
    %v953 = vtanh.pop %v937
    %v954 = vtanh.pop %v938
    %v955 = vtanh.pop %v939
    %v956 = vtanh.pop %v940
    %v957 = vtanh.pop %v941
    %v958 = vtanh.pop %v942
    %v959 = vtanh.pop %v943
    %960 = vst [vmem:[#allocation2] sm:$0x1] %v743
    %961 = vst.msk [vmem:[%s8] sm:$0xff] %vm136, %v944
    %962 = vst.msk [vmem:[%s8 + $0x8] sm:$0xff] %vm136, %v945
    %963 = vst.msk [vmem:[%s8 + $0x10] sm:$0xff] %vm136, %v946
    %964 = vst.msk [vmem:[%s8 + $0x18] sm:$0xff] %vm136, %v947
    %965 = vst.msk [vmem:[%s8 + $0x20] sm:$0xff] %vm136, %v948
    %966 = vst.msk [vmem:[%s8 + $0x28] sm:$0xff] %vm136, %v949
    %967 = vst.msk [vmem:[%s8 + $0x30] sm:$0xff] %vm136, %v950
    %968 = vst.msk [vmem:[%s8 + $0x38] sm:$0xff] %vm136, %v951
    %969 = vst.msk [vmem:[%s8 + $0x40] sm:$0xff] %vm136, %v952
    %970 = vst.msk [vmem:[%s8 + $0x48] sm:$0xff] %vm136, %v953
    %971 = vst.msk [vmem:[%s8 + $0x50] sm:$0xff] %vm136, %v954
    %972 = vst.msk [vmem:[%s8 + $0x58] sm:$0xff] %vm136, %v955
    %973 = vst.msk [vmem:[%s8 + $0x60] sm:$0xff] %vm136, %v956
    %974 = vst.msk [vmem:[%s8 + $0x68] sm:$0xff] %vm136, %v957
    %975 = vst.msk [vmem:[%s8 + $0x70] sm:$0xff] %vm136, %v958
    %976 = vst.msk [vmem:[%s8 + $0x78] sm:$0xff] %vm136, %v959
    %977 = vst [vmem:[#allocation4] sm:$0xff] %v596
    %978 = vst [vmem:[#allocation4 + $0x8] sm:$0xff] %v598
    %979 = vst [vmem:[#allocation4 + $0x10] sm:$0xff] %v600
    %980 = vst [vmem:[#allocation4 + $0x18] sm:$0xff] %v602
    %981 = vst [vmem:[#allocation4 + $0x20] sm:$0xff] %v604
    %982 = vst [vmem:[#allocation4 + $0x28] sm:$0xff] %v606
    %983 = vst [vmem:[#allocation4 + $0x30] sm:$0xff] %v608
    %984 = vst [vmem:[#allocation4 + $0x38] sm:$0xff] %v610
    %985 = vst [vmem:[#allocation4 + $0x40] sm:$0xff] %v612
    %986 = vst [vmem:[#allocation4 + $0x48] sm:$0xff] %v614
    %987 = vst [vmem:[#allocation4 + $0x50] sm:$0xff] %v616
    %988 = vst [vmem:[#allocation4 + $0x58] sm:$0xff] %v618
    %989 = vst [vmem:[#allocation4 + $0x60] sm:$0xff] %v620
    %990 = vst [vmem:[#allocation4 + $0x68] sm:$0xff] %v622
    %991 = vst [vmem:[#allocation4 + $0x70] sm:$0xff] %v624
    %992 = vst [vmem:[#allocation4 + $0x78] sm:$0xff] %v626
    // Predicated region
    $region30: #{tpu_custom_call.1} parent=1 // pred_check
      _
    $region31: #{tpu_custom_call.1} parent=1 // pred_check_branch
      %994 = sbr.rel (0) target = $region33
    $region32: #{tpu_custom_call.1} parent=1 // pred_region
      %s996 = ssub.s32 16, 16
      %997 = vsyncadd [#allocation3], %s996
      %s999 = sshll.u32 [#allocation2], 4
      %s1000 = int_to_ptr.vmem [resolvable:$true] %s999
      %1002 = dma.vmem_to_hbm [thread:$0]  %s1000, 16, %s7, [#allocation3]
    $region33: #{tpu_custom_call.1} parent=1 // pred_fallthru
      _
    // Predicated region
    $region34: #{tpu_custom_call.1} parent=1 // pred_check
      _
    $region35: #{tpu_custom_call.1} parent=1 // pred_check_branch
      %1004 = sbr.rel (0) target = $region37
    $region36: #{tpu_custom_call.1} parent=1 // pred_region
      _
    $region37: #{tpu_custom_call.1} parent=1 // pred_fallthru
      _
    // Predicated region
    $region38: #{tpu_custom_call.1} parent=1 // pred_check
      _
    $region39: #{tpu_custom_call.1} parent=1 // pred_check_branch
      %1006 = sbr.rel (0) target = $region41
    $region40: #{tpu_custom_call.1} parent=1 // pred_region
      %s1008 = ssub.s32 2048, 2048
      %1009 = vsyncadd [#allocation5], %s1008
      %s1010 = sshll.u32 [#allocation4], 4
      %s1011 = int_to_ptr.vmem [resolvable:$true] %s1010
      %1016 = dma.vmem_to_hbm [thread:$0]  %s1011, 2048, %s9, [#allocation5], 128, 128, 8
    $region41: #{tpu_custom_call.1} parent=1 // pred_fallthru
      _
    // Predicated region
    $region42: #{tpu_custom_call.1} parent=1 // pred_check
      _
    $region43: #{tpu_custom_call.1} parent=1 // pred_check_branch
      %1018 = sbr.rel (0) target = $region45
    $region44: #{tpu_custom_call.1} parent=1 // pred_region
      %1019 = dma.done [#allocation3], 16
    $region45: #{tpu_custom_call.1} parent=1 // pred_fallthru
      _
    // Predicated region
    $region46: #{tpu_custom_call.1} parent=1 // pred_check
      _
    $region47: #{tpu_custom_call.1} parent=1 // pred_check_branch
      %1021 = sbr.rel (0) target = $region49
    $region48: #{tpu_custom_call.1} parent=1 // pred_region
      _
    $region49: #{tpu_custom_call.1} parent=1 // pred_fallthru
      _
    // Predicated region
    $region50: #{tpu_custom_call.1} parent=1 // pred_check
      _
    $region51: #{tpu_custom_call.1} parent=1 // pred_check_branch
      %1023 = sbr.rel (0) target = $region53
    $region52: #{tpu_custom_call.1} parent=1 // pred_region
      %1024 = dma.done [#allocation5], 2048
    $region53: #{tpu_custom_call.1} parent=1 // pred_fallthru
      _
    %1025 = vsyncpa [#allocation3], 1
    %1026 = vsyncpa [#allocation5], 1

</llo_original>
